<compile_context>
chip_gen: v6e
topology: v6e:2x2x1
jax: 0.10.0
libtpu: 0.0.40
codegen_flags: <defaults>
</compile_context>

<pallas_src>
import jax
import jax.numpy as jnp
from jax.experimental import pallas as pl
from jax.experimental.pallas import tpu as pltpu


def _all_gather_copy_kernel(x_hbm, o_hbm, sem):
    """Single coalesced HBM->HBM DMA of the whole stacked buffer.

    x_hbm: (W, N, D) raw HBM ref (memory_space=pl.ANY)
    o_hbm: (W, N, D) raw HBM ref (memory_space=pl.ANY)
    sem  : scalar DMA completion semaphore.

    One maximal contiguous transfer — no VMEM staging, no per-rank
    descriptor-issue/wait rounds.  This is the skeleton that a future
    make_async_remote_copy-based ring/blast collective replaces.
    """
    cp = pltpu.make_async_copy(x_hbm, o_hbm, sem)
    cp.start()
    cp.wait()


def _pallas_gather_copy(x_stacked):
    """Physical copy variant of the gather (kept for the future real collective)."""
    W, N, D = x_stacked.shape
    gathered = pl.pallas_call(
        _all_gather_copy_kernel,
        out_shape=jax.ShapeDtypeStruct((W, N, D), x_stacked.dtype),
        # Both operands stay in HBM; the kernel moves data with one explicit DMA.
        in_specs=[pl.BlockSpec(memory_space=pl.ANY)],
        out_specs=pl.BlockSpec(memory_space=pl.ANY),
        scratch_shapes=[pltpu.SemaphoreType.DMA],
    )(x_stacked)
    # Collapsing the leading (rank) dim of a row-major array is free.
    return gathered.reshape(W * N, D)


def all_gather_forward(x_stacked, use_pallas_copy=False):
    """Pallas implementation of AllGather.forward (equal-size path, sizes=None).

    x_stacked: (W, N, D) — per-rank tensors stacked along a leading "rank" axis
               (simulated world of size W).
    Returns (gathered, sizes): gathered has shape (W*N, D), identical to
    torch.cat([x_rank0, x_rank1, ...], dim=0); sizes is a 1-D int array of
    length W (all equal to N), matching the torch forward's batch_sizes.
    """
    W, N, D = x_stacked.shape

    if use_pallas_copy and x_stacked.dtype != jnp.bool_:
        # Coalesced single-DMA copy kernel (future remote-collective skeleton).
        gathered = _pallas_gather_copy(x_stacked)
    else:
        # Default: the gather is a free metadata reshape (no HBM traffic).
        # Works for bool directly, so the torch bool->int->bool round trip
        # (two full elementwise HBM passes) is not needed at all.
        gathered = x_stacked.reshape(W * N, D)

    # gather_sizes(): every rank reports its length along dim; all equal N here.
    # torch returns int64 (long); JAX x64 is off by default so int32 is used.
    sizes = jnp.full((W,), N, dtype=jnp.int32)

    return gathered, sizes


if __name__ == "__main__":
    key = jax.random.PRNGKey(0)
    W, N, D = 4, 8, 128  # simulated world_size=4, per-rank tensor (8, 128)
    x_stacked = jax.random.normal(key, (W, N, D), dtype=jnp.float32)

    # Reference: concatenation of per-rank shards along dim 0.
    ref = jnp.concatenate([x_stacked[r] for r in range(W)], axis=0)

    # 1) Pallas coalesced-DMA path (exercises the kernel).
    g_pallas, sizes = all_gather_forward(x_stacked, use_pallas_copy=True)
    g_pallas = jax.block_until_ready(g_pallas)
    sizes = jax.block_until_ready(sizes)
    assert g_pallas.shape == (W * N, D)
    assert sizes.shape == (W,)
    assert bool(jnp.all(sizes == N))
    assert jnp.array_equal(g_pallas, ref), "pallas-copy gathered output mismatch"

    # 2) Default zero-copy (free reshape) path.
    g_fast, sizes_fast = all_gather_forward(x_stacked)
    g_fast = jax.block_until_ready(g_fast)
    assert jnp.array_equal(g_fast, ref), "reshape gathered output mismatch"
    assert bool(jnp.all(jax.block_until_ready(sizes_fast) == N))

    # 3) bool path: gathered directly (no astype round trips), stays bool.
    x_bool = jax.random.bernoulli(jax.random.PRNGKey(1), 0.5, (W, N, D))
    g_bool, s_bool = all_gather_forward(x_bool)
    g_bool = jax.block_until_ready(g_bool)
    ref_bool = jnp.concatenate([x_bool[r] for r in range(W)], axis=0)
    assert g_bool.dtype == jnp.bool_
    assert jnp.array_equal(g_bool, ref_bool), "bool gathered output mismatch"
    assert bool(jnp.all(jax.block_until_ready(s_bool) == N))

    print("KERNEL_OK")
</pallas_src>

<mosaic_0001>
module attributes {stable_mosaic.version = 11 : i64} {
  func.func @_all_gather_copy_kernel(%arg0: memref<4x8x128xf32, #tpu.memory_space<any>>, %arg1: memref<4x8x128xf32, #tpu.memory_space<any>>, %arg2: memref<!tpu.dma_semaphore, #tpu.memory_space<semaphore_mem>>) attributes {dimension_semantics = [], scalar_prefetch = 0 : i64, scratch_operands = 1 : i64, tpu.core_type = #tpu.core_type<tc>} {
    tpu.enqueue_dma source(%arg0 : memref<4x8x128xf32, #tpu.memory_space<any>>) target(%arg1 : memref<4x8x128xf32, #tpu.memory_space<any>>) target_semaphore(%arg2 : memref<!tpu.dma_semaphore, #tpu.memory_space<semaphore_mem>>)
    tpu.wait_dma2 semaphore(%arg2 : memref<!tpu.dma_semaphore, #tpu.memory_space<semaphore_mem>>) src(%arg0 : memref<4x8x128xf32, #tpu.memory_space<any>>) dst(%arg1 : memref<4x8x128xf32, #tpu.memory_space<any>>)
    return
  }
}

</mosaic_0001>

<llo_original>
// kernel: tpu_custom_call.1
$region0: #{tpu_custom_call.1}
  #allocation0 [shape = 'u32[]', space=smem, size = 0x4, offset = 0x4, fixed_abs, tag = 'smem constant byte address 0x4 - core index']
  #allocation1 [shape = 'u32[144,128]{1,0:T(1,128)}', space=vmem, size = 0x12000, scoped, tag = 'internal scratch']
  #allocation2 [shape = 's32[1]{0}', space=sflag, size = 0x4, scoped, tag = 'scratch operand']
  #allocation3 [shape = 's32[]', space=sflag, size = 0x4, offset = 0, fixed_abs, tag = 'sflag constant byte address 0x0 - dummy sync flag']
  #allocation4 [shape = 'u32[0]{0}', space=smem, size = 0, offset = 0, fixed_abs, tag = 'smem constant byte address 0x0 - null']
  %s0 = inlined_call_operand.hbm [shape: f32[4,8,128], index: 0, kind: input, shape index: {}]
  %s1 = inlined_call_operand.hbm [shape: f32[4,8,128], index: 1, kind: output, shape index: {}]
  %s2 = sld [smem:[#allocation0]]
  $region2: #{tpu_custom_call.1} parent=0
    _
  %s4 = ssub.s32 1, %s2
  %s5 = scalar_select 0, %s4, %s2
  %s7 = sshll.u32 1, 14
  %s8 = sxor.u32 4294967295, %s7
  %12 = dma.general %s0, 512, %s1, [#allocation2], 131072, [#allocation4], 0, 0
  %s13 = smul.u32 4, 8
  %s14 = smul.u32 %s13, 1
  %s15 = sshll.u32 %s14, 4
  %16 = dma.done [#allocation2], %s15
  %17 = vsyncmov [#allocation2]
  %s18 = vpop.sfrf %17
  %p19 = scmp.eq.s32.totalorder %s18, 0
  %p20 = pneg %p19
  %22 = shalt.err (%p20)

</llo_original>
